<compile_context>
chip_gen: v7x
topology: tpu7x:2x2x1
jax: 0.10.0
libtpu: 0.0.40
codegen_flags: <defaults>
</compile_context>

<pallas_src>
import jax
import jax.numpy as jnp
from jax import lax
from jax.experimental import pallas as pl
from jax.experimental.pallas import tpu as pltpu

# ---------------- model hyperparameters (consistent with the module) ---------
SEQ_INPUT_DIM = 10
NUM_VALUE_DIM = 29
DEST_NUM = 50
FLAG_NUM = 20
HOUR_NUM = 24
WEEKDAY_NUM = 7
HIDDEN_SIZE = 32
STATIC_HIDDEN = 32
EMB_DEST, EMB_FLAG, EMB_HOUR, EMB_WD = 16, 8, 4, 3
EMB_TOTAL = EMB_DEST + EMB_FLAG + EMB_HOUR + EMB_WD          # 31
FC1_IN = HIDDEN_SIZE + STATIC_HIDDEN + EMB_TOTAL             # 95
FC1_OUT = 64
OUT_DIM = 1
T = 3
BATCH = 8
GATES = 4 * HIDDEN_SIZE                                      # 128
XPAD = 32                                                    # T*D_in (30) padded
NUMPAD = 32                                                  # num dim (29) padded
EMB_ROWS = DEST_NUM + FLAG_NUM + HOUR_NUM + WEEKDAY_NUM      # 101
EMB_ROWS_PAD = 128                                           # exact (B,128) sel vreg

# ---------------- single packed-slab layout (static compile-time offsets) ----
SLAB_LANES = T * GATES                                       # 384
SLAB_ROWS = 200
R_WBD = 0          # rows 0:30,   lanes 0:384   block-diag input->gates weights
R_WHH = 32         # rows 32:64,  lanes 0:128   h->gates weights
R_WNUM = 32        # rows 32:61,  lanes 128:160 fc_num_values weight
L_WNUM = 128
R_W1 = 64          # rows 64:128, lanes 0:64    fc1 weights [w1_seq; w1_num]
R_EMB = 64         # rows 64:192, lanes 128:192 fc1-projected embedding tables
L_EMB = 128
MR_BG = 192        # row 192, lanes 0:384   gate bias (b_ih+b_hh) tiled x3
MR_BN = 193        # row 193, lanes 0:32    fc_num_values bias
MR_B1 = 194        # row 194, lanes 0:64    fc1 bias
MR_W2 = 195        # row 195, lanes 0:64    fc2 weight row
MR_B2 = 196        # row 196, lane 0        fc2 bias


# ------------------------------- Pallas kernel -------------------------------
def voyage_kernel(x_seq_ref,    # (B, T*D_in)=(B,30)  f32 (batch-major flatten)
                  x_num_ref,    # (B, 29)             f32
                  x_cat_ref,    # (B, 4)              int32
                  slab_ref,     # (200, 384)          f32 packed weight slab
                  out_ref):     # (B, 1)              f32
    B = x_num_ref.shape[0]
    H = HIDDEN_SIZE
    bf16 = jnp.bfloat16

    # ---- unpack the slab (static, aligned slices); MXU operands -> bf16 ----
    w_bd = slab_ref[R_WBD:R_WBD + XPAD, :].astype(bf16)                         # (32,384)
    w_hh = slab_ref[R_WHH:R_WHH + H, 0:GATES].astype(bf16)                      # (32,128)
    w_num = slab_ref[R_WNUM:R_WNUM + NUMPAD,
                     L_WNUM:L_WNUM + STATIC_HIDDEN].astype(bf16)                # (32,32)
    w1 = slab_ref[R_W1:R_W1 + 2 * H, 0:FC1_OUT].astype(bf16)                    # (64,64)
    emb = slab_ref[R_EMB:R_EMB + EMB_ROWS_PAD,
                   L_EMB:L_EMB + FC1_OUT].astype(bf16)                          # (128,64)
    b_gate3 = slab_ref[MR_BG:MR_BG + 1, :]                                      # (1,384) f32
    b_num = slab_ref[MR_BN:MR_BN + 1, 0:STATIC_HIDDEN]                          # (1,32)
    b1 = slab_ref[MR_B1:MR_B1 + 1, 0:FC1_OUT]                                   # (1,64)
    w2_row = slab_ref[MR_W2:MR_W2 + 1, 0:FC1_OUT]                               # (1,64)
    b2 = slab_ref[MR_B2:MR_B2 + 1, 0:1]                                         # (1,1)

    # ---- hoisted input projection: one (B,32)@(32,384) block-diag matmul ----
    xs = x_seq_ref[...]
    xs = jnp.concatenate(
        [xs, jnp.zeros((B, XPAD - T * SEQ_INPUT_DIM), xs.dtype)], axis=1)       # (B,32)
    x_proj = jnp.dot(xs.astype(bf16), w_bd,
                     preferred_element_type=jnp.float32) + b_gate3              # (B,384)

    # ---- LSTM recurrence: 1 MXU op + 2 EUP tanh per step on the serial path ----
    lane = lax.broadcasted_iota(jnp.int32, (B, GATES), 1)
    g_mask = (lane >= 2 * H) & (lane < 3 * H)        # lanes 64:96 use tanh (g gate)
    h = jnp.zeros((B, H), jnp.float32)
    c = jnp.zeros((B, H), jnp.float32)
    for t in range(T):  # T small & static -> fully unrolled
        gates = x_proj[:, t * GATES:(t + 1) * GATES] + jnp.dot(
            h.astype(bf16), w_hh, preferred_element_type=jnp.float32)           # (B,128)
        # single tanh over the full vreg; sigmoid(x) = 0.5*(1 + tanh(x/2))
        th = jnp.tanh(jnp.where(g_mask, gates, gates * 0.5))
        act = jnp.where(g_mask, th, 0.5 * th + 0.5)
        i_g = act[:, 0:H]
        f_g = act[:, H:2 * H]
        g_g = act[:, 2 * H:3 * H]
        o_g = act[:, 3 * H:4 * H]
        c = f_g * c + i_g * g_g
        h = o_g * jnp.tanh(c)

    # ---- static numeric branch: vec_num = relu(fc_num_values(x_num)) ----
    xn = x_num_ref[...]
    xn = jnp.concatenate(
        [xn, jnp.zeros((B, NUMPAD - NUM_VALUE_DIM), xn.dtype)], axis=1)          # (B,32)
    vec_num = jnp.maximum(
        jnp.dot(xn.astype(bf16), w_num, preferred_element_type=jnp.float32) + b_num,
        0.0)                                                                     # (B,32)

    # ---- embeddings: 4-hot (B,128) mask matmul on fc1-projected tables ----
    idx = x_cat_ref[...]                                                         # (B,4)
    lanes = lax.broadcasted_iota(jnp.int32, (B, EMB_ROWS_PAD), 1)
    sel = ((lanes == idx[:, 0:1])
           | (lanes == idx[:, 1:2] + DEST_NUM)
           | (lanes == idx[:, 2:3] + (DEST_NUM + FLAG_NUM))
           | (lanes == idx[:, 3:4] + (DEST_NUM + FLAG_NUM + HOUR_NUM))
           ).astype(bf16)                                                        # (B,128)
    emb_fc1 = jnp.dot(sel, emb, preferred_element_type=jnp.float32)              # (B,64)

    # ---- fc1 (+relu): ONE (B,64)@(64,64) matmul on concat([h, vec_num]) ----
    hv = jnp.concatenate([h, vec_num], axis=1).astype(bf16)                      # (B,64)
    hid = jnp.maximum(
        jnp.dot(hv, w1, preferred_element_type=jnp.float32) + emb_fc1 + b1, 0.0) # (B,64)

    # ---- fc2 as a lane reduction (output width 1) ----
    out_ref[...] = jnp.sum(hid * w2_row, axis=-1, keepdims=True) + b2


# ------------------------------- parameters ----------------------------------
def init_params(key):
    ks = jax.random.split(key, 12)
    s = 0.1
    return {
        # PyTorch-shaped parameters
        "w_ih": jax.random.normal(ks[0], (4 * HIDDEN_SIZE, SEQ_INPUT_DIM), jnp.float32) * s,
        "w_hh": jax.random.normal(ks[1], (4 * HIDDEN_SIZE, HIDDEN_SIZE), jnp.float32) * s,
        "b_ih": jax.random.normal(ks[2], (4 * HIDDEN_SIZE,), jnp.float32) * s,
        "b_hh": jax.random.normal(ks[3], (4 * HIDDEN_SIZE,), jnp.float32) * s,
        "fc_num_w": jax.random.normal(ks[4], (STATIC_HIDDEN, NUM_VALUE_DIM), jnp.float32) * s,
        "fc_num_b": jax.random.normal(ks[5], (STATIC_HIDDEN,), jnp.float32) * s,
        "emb_dest": jax.random.normal(ks[6], (DEST_NUM, EMB_DEST), jnp.float32) * s,
        "emb_flag": jax.random.normal(ks[7], (FLAG_NUM, EMB_FLAG), jnp.float32) * s,
        "emb_hour": jax.random.normal(ks[8], (HOUR_NUM, EMB_HOUR), jnp.float32) * s,
        "emb_wd": jax.random.normal(ks[9], (WEEKDAY_NUM, EMB_WD), jnp.float32) * s,
        "fc1_w": jax.random.normal(ks[10], (FC1_OUT, FC1_IN), jnp.float32) * s,
        "fc1_b": jnp.zeros((FC1_OUT,), jnp.float32),
        "fc2_w": jax.random.normal(ks[11], (OUT_DIM, FC1_OUT), jnp.float32) * s,
        "fc2_b": jnp.zeros((OUT_DIM,), jnp.float32),
    }


def prepare_params(p):
    """One-time repack of PyTorch-shaped params into ONE (200,384) kernel slab."""
    H = HIDDEN_SIZE
    w_ih_all = p["w_ih"].T                                    # (10,128)  gate order i,f,g,o
    w_hh_all = p["w_hh"].T                                    # (32,128)
    b_gate = (p["b_ih"] + p["b_hh"])                          # (128,)
    w_num = p["fc_num_w"].T                                   # (29,32)
    b_num = p["fc_num_b"]                                     # (32,)

    w1 = p["fc1_w"].T                                         # (95,64)
    w1_seq = w1[:H]
    w1_num = w1[H:2 * H]
    o = 2 * H
    w1_dest = w1[o:o + EMB_DEST]
    w1_flag = w1[o + EMB_DEST:o + EMB_DEST + EMB_FLAG]
    w1_hour = w1[o + EMB_DEST + EMB_FLAG:o + EMB_DEST + EMB_FLAG + EMB_HOUR]
    w1_wd = w1[o + EMB_DEST + EMB_FLAG + EMB_HOUR:]
    b1 = p["fc1_b"]                                           # (64,)

    # gather-then-linear == gather of an fc1-projected table (linearity)
    emb_proj = jnp.concatenate([
        p["emb_dest"] @ w1_dest,                              # (50,64)
        p["emb_flag"] @ w1_flag,                              # (20,64)
        p["emb_hour"] @ w1_hour,                              # (24,64)
        p["emb_wd"] @ w1_wd,                                  # (7,64)
    ], axis=0)                                                # (101,64)

    slab = jnp.zeros((SLAB_ROWS, SLAB_LANES), jnp.float32)
    # block-diagonal input->gates weight: lane (10t+d) -> lanes [128t:128(t+1)]
    for t in range(T):
        slab = slab.at[R_WBD + t * SEQ_INPUT_DIM:R_WBD + (t + 1) * SEQ_INPUT_DIM,
                       t * GATES:(t + 1) * GATES].set(w_ih_all)
    slab = slab.at[R_WHH:R_WHH + H, 0:GATES].set(w_hh_all)
    slab = slab.at[R_WNUM:R_WNUM + NUM_VALUE_DIM,
                   L_WNUM:L_WNUM + STATIC_HIDDEN].set(w_num)
    slab = slab.at[R_W1:R_W1 + H, 0:FC1_OUT].set(w1_seq)
    slab = slab.at[R_W1 + H:R_W1 + 2 * H, 0:FC1_OUT].set(w1_num)
    slab = slab.at[R_EMB:R_EMB + EMB_ROWS, L_EMB:L_EMB + FC1_OUT].set(emb_proj)
    slab = slab.at[MR_BG, :].set(jnp.tile(b_gate, T))         # (384,)
    slab = slab.at[MR_BN, 0:STATIC_HIDDEN].set(b_num)
    slab = slab.at[MR_B1, 0:FC1_OUT].set(b1)
    slab = slab.at[MR_W2, 0:FC1_OUT].set(p["fc2_w"][0])
    slab = slab.at[MR_B2, 0].set(p["fc2_b"][0])
    return slab


# ------------------------------- wrapper --------------------------------------
@jax.jit
def voyage_forward(slab, x_seq, x_num_values, x_cat_idx):
    B = x_seq.shape[0]
    # batch-major flatten (free reshape, no transpose / no casts)
    x_flat = x_seq.reshape(B, T * SEQ_INPUT_DIM)

    vmem = pl.BlockSpec(memory_space=pltpu.MemorySpace.VMEM)
    out = pl.pallas_call(
        voyage_kernel,
        out_shape=jax.ShapeDtypeStruct((B, OUT_DIM), jnp.float32),
        in_specs=[vmem] * 4,
        out_specs=vmem,
    )(x_flat, x_num_values, x_cat_idx, slab)

    return out[:, 0]  # squeeze(-1) -> (B,)


# ------------------------------- reference (plain JAX, f32) ------------------
def voyage_forward_ref(params, x_seq, x_num_values, x_cat_idx):
    B = x_seq.shape[0]
    H = HIDDEN_SIZE
    h = jnp.zeros((B, H), jnp.float32)
    c = jnp.zeros((B, H), jnp.float32)
    for t in range(T):
        g = x_seq[:, t, :] @ params["w_ih"].T + params["b_ih"] \
            + h @ params["w_hh"].T + params["b_hh"]
        i_g = jax.nn.sigmoid(g[:, 0:H])
        f_g = jax.nn.sigmoid(g[:, H:2 * H])
        g_g = jnp.tanh(g[:, 2 * H:3 * H])
        o_g = jax.nn.sigmoid(g[:, 3 * H:4 * H])
        c = f_g * c + i_g * g_g
        h = o_g * jnp.tanh(c)
    vec_num = jax.nn.relu(x_num_values @ params["fc_num_w"].T + params["fc_num_b"])
    vec_dest = params["emb_dest"][x_cat_idx[:, 0]]
    vec_flag = params["emb_flag"][x_cat_idx[:, 1]]
    vec_hour = params["emb_hour"][x_cat_idx[:, 2]]
    vec_wd = params["emb_wd"][x_cat_idx[:, 3]]
    combined = jnp.concatenate([h, vec_num, vec_dest, vec_flag, vec_hour, vec_wd], axis=1)
    hid = jax.nn.relu(combined @ params["fc1_w"].T + params["fc1_b"])
    out = hid @ params["fc2_w"].T + params["fc2_b"]
    return out[:, 0]


# ------------------------------- main ------------------------------------------
if __name__ == "__main__":
    key = jax.random.PRNGKey(0)
    k_param, k_seq, k_num, kd, kf, kh, kw = jax.random.split(key, 7)

    params = init_params(k_param)
    slab = prepare_params(params)   # one-time repack into a single kernel slab

    x_seq = jax.random.normal(k_seq, (BATCH, T, SEQ_INPUT_DIM), jnp.float32)
    x_num_values = jax.random.normal(k_num, (BATCH, NUM_VALUE_DIM), jnp.float32)
    x_cat_idx = jnp.stack([
        jax.random.randint(kd, (BATCH,), 0, DEST_NUM),
        jax.random.randint(kf, (BATCH,), 0, FLAG_NUM),
        jax.random.randint(kh, (BATCH,), 0, HOUR_NUM),
        jax.random.randint(kw, (BATCH,), 0, WEEKDAY_NUM),
    ], axis=1).astype(jnp.int32)

    y = voyage_forward(slab, x_seq, x_num_values, x_cat_idx)
    y = jax.block_until_ready(y)

    y_ref = voyage_forward_ref(params, x_seq, x_num_values, x_cat_idx)
    assert y.shape == (BATCH,)
    # bf16 MXU operands (f32 accumulation) -> relaxed tolerance vs. f32 reference
    assert jnp.allclose(y, y_ref, atol=2e-2, rtol=2e-2), (y, y_ref)

    print("KERNEL_OK")
</pallas_src>

<mosaic_0001>
module attributes {stable_mosaic.version = 11 : i64} {
  func.func @voyage_kernel(%arg0: memref<8x30xf32, #tpu.memory_space<vmem>>, %arg1: memref<8x29xf32, #tpu.memory_space<vmem>>, %arg2: memref<8x4xi32, #tpu.memory_space<vmem>>, %arg3: memref<200x384xf32, #tpu.memory_space<vmem>>, %arg4: memref<8x1xf32, #tpu.memory_space<vmem>>) attributes {dimension_semantics = [], scalar_prefetch = 0 : i64, scratch_operands = 0 : i64, tpu.core_type = #tpu.core_type<tc>} {
    %c0 = arith.constant 0 : index
    %c0_0 = arith.constant 0 : index
    %0 = vector.load %arg3[%c0, %c0_0] : memref<200x384xf32, #tpu.memory_space<vmem>>, vector<32x384xf32>
    %1 = arith.truncf %0 : vector<32x384xf32> to vector<32x384xbf16>
    %c32 = arith.constant 32 : index
    %c0_1 = arith.constant 0 : index
    %2 = vector.load %arg3[%c32, %c0_1] : memref<200x384xf32, #tpu.memory_space<vmem>>, vector<32x128xf32>
    %3 = arith.truncf %2 : vector<32x128xf32> to vector<32x128xbf16>
    %c32_2 = arith.constant 32 : index
    %c128 = arith.constant 128 : index
    %4 = vector.load %arg3[%c32_2, %c128] : memref<200x384xf32, #tpu.memory_space<vmem>>, vector<32x32xf32>
    %5 = arith.truncf %4 : vector<32x32xf32> to vector<32x32xbf16>
    %c64 = arith.constant 64 : index
    %c0_3 = arith.constant 0 : index
    %6 = vector.load %arg3[%c64, %c0_3] : memref<200x384xf32, #tpu.memory_space<vmem>>, vector<64x64xf32>
    %7 = arith.truncf %6 : vector<64x64xf32> to vector<64x64xbf16>
    %c64_4 = arith.constant 64 : index
    %c128_5 = arith.constant 128 : index
    %8 = vector.load %arg3[%c64_4, %c128_5] : memref<200x384xf32, #tpu.memory_space<vmem>>, vector<128x64xf32>
    %9 = arith.truncf %8 : vector<128x64xf32> to vector<128x64xbf16>
    %c192 = arith.constant 192 : index
    %c0_6 = arith.constant 0 : index
    %10 = vector.load %arg3[%c192, %c0_6] : memref<200x384xf32, #tpu.memory_space<vmem>>, vector<1x384xf32>
    %c193 = arith.constant 193 : index
    %c0_7 = arith.constant 0 : index
    %11 = vector.load %arg3[%c193, %c0_7] : memref<200x384xf32, #tpu.memory_space<vmem>>, vector<1x32xf32>
    %c194 = arith.constant 194 : index
    %c0_8 = arith.constant 0 : index
    %12 = vector.load %arg3[%c194, %c0_8] : memref<200x384xf32, #tpu.memory_space<vmem>>, vector<1x64xf32>
    %c195 = arith.constant 195 : index
    %c0_9 = arith.constant 0 : index
    %13 = vector.load %arg3[%c195, %c0_9] : memref<200x384xf32, #tpu.memory_space<vmem>>, vector<1x64xf32>
    %c196 = arith.constant 196 : index
    %c0_10 = arith.constant 0 : index
    %14 = vector.load %arg3[%c196, %c0_10] : memref<200x384xf32, #tpu.memory_space<vmem>>, vector<1x1xf32>
    %c0_11 = arith.constant 0 : index
    %c0_12 = arith.constant 0 : index
    %15 = vector.load %arg0[%c0_11, %c0_12] : memref<8x30xf32, #tpu.memory_space<vmem>>, vector<8x30xf32>
    %cst = arith.constant 0.000000e+00 : f32
    %16 = vector.broadcast %cst : f32 to vector<8x2xf32>
    %17 = tpu.concatenate %15, %16 in 1 : vector<8x30xf32>, vector<8x2xf32> -> vector<8x32xf32>
    %18 = arith.truncf %17 : vector<8x32xf32> to vector<8x32xbf16>
    %cst_13 = arith.constant dense<0.000000e+00> : vector<8x384xf32>
    %19 = tpu.matmul %18, %1, %cst_13 {dimension_numbers = #tpu.dot_dimension_numbers<[1], [0], [0], [1], [0, 0, 1, 1], [], []>} : vector<8x32xbf16>, vector<32x384xbf16>, vector<8x384xf32> -> vector<8x384xf32>
    %20 = vector.broadcast %10 : vector<1x384xf32> to vector<8x384xf32>
    %21 = arith.addf %19, %20 : vector<8x384xf32>
    %22 = tpu.iota {dimensions = array<i32: 1>} : vector<8x128xi32>
    %c64_i32 = arith.constant 64 : i32
    %23 = vector.broadcast %c64_i32 : i32 to vector<8x128xi32>
    %24 = arith.cmpi sge, %22, %23 : vector<8x128xi32>
    %c96_i32 = arith.constant 96 : i32
    %25 = vector.broadcast %c96_i32 : i32 to vector<8x128xi32>
    %26 = arith.cmpi slt, %22, %25 : vector<8x128xi32>
    %27 = arith.andi %24, %26 : vector<8x128xi1>
    %cst_14 = arith.constant 0.000000e+00 : f32
    %28 = vector.broadcast %cst_14 : f32 to vector<8x32xf32>
    %cst_15 = arith.constant 0.000000e+00 : f32
    %29 = vector.broadcast %cst_15 : f32 to vector<8x32xf32>
    %30 = vector.extract_strided_slice %21 {offsets = [0, 0], sizes = [8, 128], strides = [1, 1]} : vector<8x384xf32> to vector<8x128xf32>
    %31 = arith.truncf %28 : vector<8x32xf32> to vector<8x32xbf16>
    %cst_16 = arith.constant dense<0.000000e+00> : vector<8x128xf32>
    %32 = tpu.matmul %31, %3, %cst_16 {dimension_numbers = #tpu.dot_dimension_numbers<[1], [0], [0], [1], [0, 0, 1, 1], [], []>} : vector<8x32xbf16>, vector<32x128xbf16>, vector<8x128xf32> -> vector<8x128xf32>
    %33 = arith.addf %30, %32 : vector<8x128xf32>
    %cst_17 = arith.constant 5.000000e-01 : f32
    %34 = vector.broadcast %cst_17 : f32 to vector<8x128xf32>
    %35 = arith.mulf %33, %34 : vector<8x128xf32>
    %36 = arith.select %27, %33, %35 : vector<8x128xi1>, vector<8x128xf32>
    %37 = math.tanh %36 : vector<8x128xf32>
    %cst_18 = arith.constant 5.000000e-01 : f32
    %38 = vector.broadcast %cst_18 : f32 to vector<8x128xf32>
    %39 = arith.mulf %38, %37 : vector<8x128xf32>
    %cst_19 = arith.constant 5.000000e-01 : f32
    %40 = vector.broadcast %cst_19 : f32 to vector<8x128xf32>
    %41 = arith.addf %39, %40 : vector<8x128xf32>
    %42 = arith.select %27, %37, %41 : vector<8x128xi1>, vector<8x128xf32>
    %43 = vector.extract_strided_slice %42 {offsets = [0, 0], sizes = [8, 32], strides = [1, 1]} : vector<8x128xf32> to vector<8x32xf32>
    %44 = vector.extract_strided_slice %42 {offsets = [0, 32], sizes = [8, 32], strides = [1, 1]} : vector<8x128xf32> to vector<8x32xf32>
    %45 = vector.extract_strided_slice %42 {offsets = [0, 64], sizes = [8, 32], strides = [1, 1]} : vector<8x128xf32> to vector<8x32xf32>
    %46 = vector.extract_strided_slice %42 {offsets = [0, 96], sizes = [8, 32], strides = [1, 1]} : vector<8x128xf32> to vector<8x32xf32>
    %47 = arith.mulf %44, %29 : vector<8x32xf32>
    %48 = arith.mulf %43, %45 : vector<8x32xf32>
    %49 = arith.addf %47, %48 : vector<8x32xf32>
    %50 = math.tanh %49 : vector<8x32xf32>
    %51 = arith.mulf %46, %50 : vector<8x32xf32>
    %52 = vector.extract_strided_slice %21 {offsets = [0, 128], sizes = [8, 128], strides = [1, 1]} : vector<8x384xf32> to vector<8x128xf32>
    %53 = arith.truncf %51 : vector<8x32xf32> to vector<8x32xbf16>
    %cst_20 = arith.constant dense<0.000000e+00> : vector<8x128xf32>
    %54 = tpu.matmul %53, %3, %cst_20 {dimension_numbers = #tpu.dot_dimension_numbers<[1], [0], [0], [1], [0, 0, 1, 1], [], []>} : vector<8x32xbf16>, vector<32x128xbf16>, vector<8x128xf32> -> vector<8x128xf32>
    %55 = arith.addf %52, %54 : vector<8x128xf32>
    %cst_21 = arith.constant 5.000000e-01 : f32
    %56 = vector.broadcast %cst_21 : f32 to vector<8x128xf32>
    %57 = arith.mulf %55, %56 : vector<8x128xf32>
    %58 = arith.select %27, %55, %57 : vector<8x128xi1>, vector<8x128xf32>
    %59 = math.tanh %58 : vector<8x128xf32>
    %cst_22 = arith.constant 5.000000e-01 : f32
    %60 = vector.broadcast %cst_22 : f32 to vector<8x128xf32>
    %61 = arith.mulf %60, %59 : vector<8x128xf32>
    %cst_23 = arith.constant 5.000000e-01 : f32
    %62 = vector.broadcast %cst_23 : f32 to vector<8x128xf32>
    %63 = arith.addf %61, %62 : vector<8x128xf32>
    %64 = arith.select %27, %59, %63 : vector<8x128xi1>, vector<8x128xf32>
    %65 = vector.extract_strided_slice %64 {offsets = [0, 0], sizes = [8, 32], strides = [1, 1]} : vector<8x128xf32> to vector<8x32xf32>
    %66 = vector.extract_strided_slice %64 {offsets = [0, 32], sizes = [8, 32], strides = [1, 1]} : vector<8x128xf32> to vector<8x32xf32>
    %67 = vector.extract_strided_slice %64 {offsets = [0, 64], sizes = [8, 32], strides = [1, 1]} : vector<8x128xf32> to vector<8x32xf32>
    %68 = vector.extract_strided_slice %64 {offsets = [0, 96], sizes = [8, 32], strides = [1, 1]} : vector<8x128xf32> to vector<8x32xf32>
    %69 = arith.mulf %66, %49 : vector<8x32xf32>
    %70 = arith.mulf %65, %67 : vector<8x32xf32>
    %71 = arith.addf %69, %70 : vector<8x32xf32>
    %72 = math.tanh %71 : vector<8x32xf32>
    %73 = arith.mulf %68, %72 : vector<8x32xf32>
    %74 = vector.extract_strided_slice %21 {offsets = [0, 256], sizes = [8, 128], strides = [1, 1]} : vector<8x384xf32> to vector<8x128xf32>
    %75 = arith.truncf %73 : vector<8x32xf32> to vector<8x32xbf16>
    %cst_24 = arith.constant dense<0.000000e+00> : vector<8x128xf32>
    %76 = tpu.matmul %75, %3, %cst_24 {dimension_numbers = #tpu.dot_dimension_numbers<[1], [0], [0], [1], [0, 0, 1, 1], [], []>} : vector<8x32xbf16>, vector<32x128xbf16>, vector<8x128xf32> -> vector<8x128xf32>
    %77 = arith.addf %74, %76 : vector<8x128xf32>
    %cst_25 = arith.constant 5.000000e-01 : f32
    %78 = vector.broadcast %cst_25 : f32 to vector<8x128xf32>
    %79 = arith.mulf %77, %78 : vector<8x128xf32>
    %80 = arith.select %27, %77, %79 : vector<8x128xi1>, vector<8x128xf32>
    %81 = math.tanh %80 : vector<8x128xf32>
    %cst_26 = arith.constant 5.000000e-01 : f32
    %82 = vector.broadcast %cst_26 : f32 to vector<8x128xf32>
    %83 = arith.mulf %82, %81 : vector<8x128xf32>
    %cst_27 = arith.constant 5.000000e-01 : f32
    %84 = vector.broadcast %cst_27 : f32 to vector<8x128xf32>
    %85 = arith.addf %83, %84 : vector<8x128xf32>
    %86 = arith.select %27, %81, %85 : vector<8x128xi1>, vector<8x128xf32>
    %87 = vector.extract_strided_slice %86 {offsets = [0, 0], sizes = [8, 32], strides = [1, 1]} : vector<8x128xf32> to vector<8x32xf32>
    %88 = vector.extract_strided_slice %86 {offsets = [0, 32], sizes = [8, 32], strides = [1, 1]} : vector<8x128xf32> to vector<8x32xf32>
    %89 = vector.extract_strided_slice %86 {offsets = [0, 64], sizes = [8, 32], strides = [1, 1]} : vector<8x128xf32> to vector<8x32xf32>
    %90 = vector.extract_strided_slice %86 {offsets = [0, 96], sizes = [8, 32], strides = [1, 1]} : vector<8x128xf32> to vector<8x32xf32>
    %91 = arith.mulf %88, %71 : vector<8x32xf32>
    %92 = arith.mulf %87, %89 : vector<8x32xf32>
    %93 = arith.addf %91, %92 : vector<8x32xf32>
    %94 = math.tanh %93 : vector<8x32xf32>
    %95 = arith.mulf %90, %94 : vector<8x32xf32>
    %c0_28 = arith.constant 0 : index
    %c0_29 = arith.constant 0 : index
    %96 = vector.load %arg1[%c0_28, %c0_29] : memref<8x29xf32, #tpu.memory_space<vmem>>, vector<8x29xf32>
    %cst_30 = arith.constant 0.000000e+00 : f32
    %97 = vector.broadcast %cst_30 : f32 to vector<8x3xf32>
    %98 = tpu.concatenate %96, %97 in 1 : vector<8x29xf32>, vector<8x3xf32> -> vector<8x32xf32>
    %99 = arith.truncf %98 : vector<8x32xf32> to vector<8x32xbf16>
    %cst_31 = arith.constant dense<0.000000e+00> : vector<8x32xf32>
    %100 = tpu.matmul %99, %5, %cst_31 {dimension_numbers = #tpu.dot_dimension_numbers<[1], [0], [0], [1], [0, 0, 1, 1], [], []>} : vector<8x32xbf16>, vector<32x32xbf16>, vector<8x32xf32> -> vector<8x32xf32>
    %101 = vector.broadcast %11 : vector<1x32xf32> to vector<8x32xf32>
    %102 = arith.addf %100, %101 : vector<8x32xf32>
    %cst_32 = arith.constant 0.000000e+00 : f32
    %103 = vector.broadcast %cst_32 : f32 to vector<8x32xf32>
    %104 = arith.maximumf %102, %103 : vector<8x32xf32>
    %c0_33 = arith.constant 0 : index
    %c0_34 = arith.constant 0 : index
    %105 = vector.load %arg2[%c0_33, %c0_34] : memref<8x4xi32, #tpu.memory_space<vmem>>, vector<8x4xi32>
    %106 = tpu.iota {dimensions = array<i32: 1>} : vector<8x128xi32>
    %107 = vector.extract_strided_slice %105 {offsets = [0, 0], sizes = [8, 1], strides = [1, 1]} : vector<8x4xi32> to vector<8x1xi32>
    %108 = vector.broadcast %107 : vector<8x1xi32> to vector<8x128xi32>
    %109 = arith.cmpi eq, %106, %108 : vector<8x128xi32>
    %110 = vector.extract_strided_slice %105 {offsets = [0, 1], sizes = [8, 1], strides = [1, 1]} : vector<8x4xi32> to vector<8x1xi32>
    %c50_i32 = arith.constant 50 : i32
    %111 = vector.broadcast %c50_i32 : i32 to vector<8x1xi32>
    %112 = arith.addi %110, %111 : vector<8x1xi32>
    %113 = vector.broadcast %112 : vector<8x1xi32> to vector<8x128xi32>
    %114 = arith.cmpi eq, %106, %113 : vector<8x128xi32>
    %115 = arith.ori %109, %114 : vector<8x128xi1>
    %116 = vector.extract_strided_slice %105 {offsets = [0, 2], sizes = [8, 1], strides = [1, 1]} : vector<8x4xi32> to vector<8x1xi32>
    %c70_i32 = arith.constant 70 : i32
    %117 = vector.broadcast %c70_i32 : i32 to vector<8x1xi32>
    %118 = arith.addi %116, %117 : vector<8x1xi32>
    %119 = vector.broadcast %118 : vector<8x1xi32> to vector<8x128xi32>
    %120 = arith.cmpi eq, %106, %119 : vector<8x128xi32>
    %121 = arith.ori %115, %120 : vector<8x128xi1>
    %122 = vector.extract_strided_slice %105 {offsets = [0, 3], sizes = [8, 1], strides = [1, 1]} : vector<8x4xi32> to vector<8x1xi32>
    %c94_i32 = arith.constant 94 : i32
    %123 = vector.broadcast %c94_i32 : i32 to vector<8x1xi32>
    %124 = arith.addi %122, %123 : vector<8x1xi32>
    %125 = vector.broadcast %124 : vector<8x1xi32> to vector<8x128xi32>
    %126 = arith.cmpi eq, %106, %125 : vector<8x128xi32>
    %127 = arith.ori %121, %126 : vector<8x128xi1>
    %128 = arith.extui %127 : vector<8x128xi1> to vector<8x128xi32>
    %129 = arith.sitofp %128 : vector<8x128xi32> to vector<8x128xf32>
    %130 = arith.truncf %129 : vector<8x128xf32> to vector<8x128xbf16>
    %cst_35 = arith.constant dense<0.000000e+00> : vector<8x64xf32>
    %131 = tpu.matmul %130, %9, %cst_35 {dimension_numbers = #tpu.dot_dimension_numbers<[1], [0], [0], [1], [0, 0, 1, 1], [], []>} : vector<8x128xbf16>, vector<128x64xbf16>, vector<8x64xf32> -> vector<8x64xf32>
    %132 = tpu.concatenate %95, %104 in 1 : vector<8x32xf32>, vector<8x32xf32> -> vector<8x64xf32>
    %133 = arith.truncf %132 : vector<8x64xf32> to vector<8x64xbf16>
    %cst_36 = arith.constant dense<0.000000e+00> : vector<8x64xf32>
    %134 = tpu.matmul %133, %7, %cst_36 {dimension_numbers = #tpu.dot_dimension_numbers<[1], [0], [0], [1], [0, 0, 1, 1], [], []>} : vector<8x64xbf16>, vector<64x64xbf16>, vector<8x64xf32> -> vector<8x64xf32>
    %135 = arith.addf %134, %131 : vector<8x64xf32>
    %136 = vector.broadcast %12 : vector<1x64xf32> to vector<8x64xf32>
    %137 = arith.addf %135, %136 : vector<8x64xf32>
    %cst_37 = arith.constant 0.000000e+00 : f32
    %138 = vector.broadcast %cst_37 : f32 to vector<8x64xf32>
    %139 = arith.maximumf %137, %138 : vector<8x64xf32>
    %140 = vector.broadcast %13 : vector<1x64xf32> to vector<8x64xf32>
    %141 = arith.mulf %139, %140 : vector<8x64xf32>
    %cst_38 = arith.constant dense<0.000000e+00> : vector<8xf32>
    %142 = vector.multi_reduction <add>, %141, %cst_38 [1] : vector<8x64xf32> to vector<8xf32>
    %143 = vector.shape_cast %142 : vector<8xf32> to vector<8x1xf32>
    %144 = vector.broadcast %14 : vector<1x1xf32> to vector<8x1xf32>
    %145 = arith.addf %143, %144 : vector<8x1xf32>
    %c0_39 = arith.constant 0 : index
    %c0_40 = arith.constant 0 : index
    %146 = vector.load %arg4[%c0_39, %c0_40] : memref<8x1xf32, #tpu.memory_space<vmem>>, vector<8x1xf32>
    tpu.vector_store %arg4[%c0_39, %c0_40], %145 {strides = array<i32>} : memref<8x1xf32, #tpu.memory_space<vmem>>, vector<8x1xf32>,
    return
  }
}

</mosaic_0001>

<llo_original>
// kernel: voyage_forward.1
$region0: #{voyage_forward.1}
  #allocation0 [shape = 'u32[]', space=smem, size = 0x4, offset = 0x4, fixed_abs, tag = 'smem constant byte address 0x4 - core index']
  #allocation1 [shape = 'u32[144,128]{1,0:T(1,128)}', space=vmem, size = 0x12000, scoped, tag = 'internal scratch']
  %s0 = inlined_call_operand.vmem [shape: f32[8,30], index: 0, kind: input, shape index: {}]
  %s1 = inlined_call_operand.vmem [shape: f32[8,29], index: 1, kind: input, shape index: {}]
  %s2 = inlined_call_operand.vmem [shape: s32[8,4], index: 2, kind: input, shape index: {}]
  %s3 = inlined_call_operand.hbm [shape: f32[200,384], index: 3, kind: input, shape index: {}]
  %s4 = inlined_call_operand.vmem [shape: f32[8,1], index: 4, kind: output, shape index: {}]
  %s5 = sld [smem:[#allocation0]]
  $region30: #{voyage_forward.1} parent=0
    _
  %s7 = ssub.s32 1, %s5
  %s8 = scalar_select 0, %s7, %s5
  $region1: #{voyage_forward.1} parent=0
    #allocation2 [shape = 'u8[307200]{0}', space=vmem, size = 0x4b000, scoped, tag = 'input window, operand 3, single buffered']
    #allocation3 [shape = 's32[1]{0}', space=sflag, size = 0x4, scoped, tag = 'scoped memory for voyage_forward.1']
    %9 = vsyncpa [#allocation3], 0
    // Predicated region
    $region2: #{voyage_forward.1} parent=1 // pred_check
      _
    $region3: #{voyage_forward.1} parent=1 // pred_check_branch
      %11 = sbr.rel (0) target = $region5
    $region4: #{voyage_forward.1} parent=1 // pred_region
      _
    $region5: #{voyage_forward.1} parent=1 // pred_fallthru
      _
    // Predicated region
    $region6: #{voyage_forward.1} parent=1 // pred_check
      _
    $region7: #{voyage_forward.1} parent=1 // pred_check_branch
      %13 = sbr.rel (0) target = $region9
    $region8: #{voyage_forward.1} parent=1 // pred_region
      _
    $region9: #{voyage_forward.1} parent=1 // pred_fallthru
      _
    // Predicated region
    $region10: #{voyage_forward.1} parent=1 // pred_check
      _
    $region11: #{voyage_forward.1} parent=1 // pred_check_branch
      %15 = sbr.rel (0) target = $region13
    $region12: #{voyage_forward.1} parent=1 // pred_region
      _
    $region13: #{voyage_forward.1} parent=1 // pred_fallthru
      _
    // Predicated region
    $region14: #{voyage_forward.1} parent=1 // pred_check
      _
    $region15: #{voyage_forward.1} parent=1 // pred_check_branch
      %17 = sbr.rel (0) target = $region17
    $region16: #{voyage_forward.1} parent=1 // pred_region
      %s19 = ssub.s32 9600, 9600
      %20 = vsyncadd [#allocation3], %s19
      %s21 = sshll.u32 [#allocation2], 4
      %s22 = int_to_ptr.vmem [resolvable:$true] %s21
      %27 = dma.hbm_to_vmem [thread:$0]  %s3, 9600, %s22, [#allocation3], 384, 384, 24
    $region17: #{voyage_forward.1} parent=1 // pred_fallthru
      _
    // Predicated region
    $region18: #{voyage_forward.1} parent=1 // pred_check
      _
    $region19: #{voyage_forward.1} parent=1 // pred_check_branch
      %29 = sbr.rel (0) target = $region21
    $region20: #{voyage_forward.1} parent=1 // pred_region
      %30 = dma.done [#allocation3], 9600
    $region21: #{voyage_forward.1} parent=1 // pred_fallthru
      _
    %v32 = vld [vmem:[#allocation2] sm:$0xff]
    %v33 = vld [vmem:[#allocation2 + $0x8] sm:$0xff]
    %v34 = vld [vmem:[#allocation2 + $0x10] sm:$0xff]
    %v35 = vld [vmem:[#allocation2 + $0x18] sm:$0xff]
    %v36 = vld [vmem:[#allocation2 + $0x20] sm:$0xff]
    %v37 = vld [vmem:[#allocation2 + $0x28] sm:$0xff]
    %v38 = vld [vmem:[#allocation2 + $0x30] sm:$0xff]
    %v39 = vld [vmem:[#allocation2 + $0x38] sm:$0xff]
    %v40 = vld [vmem:[#allocation2 + $0x40] sm:$0xff]
    %v41 = vld [vmem:[#allocation2 + $0x48] sm:$0xff]
    %v42 = vld [vmem:[#allocation2 + $0x50] sm:$0xff]
    %v43 = vld [vmem:[#allocation2 + $0x58] sm:$0xff]
    %v44 = vpack.c.bf16 %v35, %v32
    %v45 = vpack.c.bf16 %v36, %v33
    %v46 = vpack.c.bf16 %v37, %v34
    %v47 = vpack.c.bf16 %v41, %v38
    %v48 = vpack.c.bf16 %v42, %v39
    %v49 = vpack.c.bf16 %v43, %v40
    %v50 = vld [vmem:[#allocation2 + $0x60] sm:$0xff]
    %v51 = vld [vmem:[#allocation2 + $0x78] sm:$0xff]
    %v52 = vld [vmem:[#allocation2 + $0x90] sm:$0xff]
    %v53 = vld [vmem:[#allocation2 + $0xa8] sm:$0xff]
    %v54 = vpack.c.bf16 %v51, %v50
    %v55 = vpack.c.bf16 %v53, %v52
    %v56 = vld [vmem:[#allocation2 + $0x68] sm:$0xff]
    %v57 = vld [vmem:[#allocation2 + $0x80] sm:$0xff]
    %v58 = vld [vmem:[#allocation2 + $0x98] sm:$0xff]
    %v59 = vld [vmem:[#allocation2 + $0xb0] sm:$0xff]
    %v60 = vpack.c.bf16 %v57, %v56
    %v61 = vpack.c.bf16 %v59, %v58
    %v62 = vld [vmem:[#allocation2 + $0xc0] sm:$0xff]
    %v63 = vld [vmem:[#allocation2 + $0xd8] sm:$0xff]
    %v64 = vld [vmem:[#allocation2 + $0xf0] sm:$0xff]
    %v65 = vld [vmem:[#allocation2 + $0x108] sm:$0xff]
    %v66 = vld [vmem:[#allocation2 + $0x120] sm:$0xff]
    %v67 = vld [vmem:[#allocation2 + $0x138] sm:$0xff]
    %v68 = vld [vmem:[#allocation2 + $0x150] sm:$0xff]
    %v69 = vld [vmem:[#allocation2 + $0x168] sm:$0xff]
    %v70 = vpack.c.bf16 %v63, %v62
    %v71 = vpack.c.bf16 %v65, %v64
    %v72 = vpack.c.bf16 %v67, %v66
    %v73 = vpack.c.bf16 %v69, %v68
    %v74 = vld [vmem:[#allocation2 + $0xc8] sm:$0xff]
    %v75 = vld [vmem:[#allocation2 + $0xe0] sm:$0xff]
    %v76 = vld [vmem:[#allocation2 + $0xf8] sm:$0xff]
    %v77 = vld [vmem:[#allocation2 + $0x110] sm:$0xff]
    %v78 = vld [vmem:[#allocation2 + $0x128] sm:$0xff]
    %v79 = vld [vmem:[#allocation2 + $0x140] sm:$0xff]
    %v80 = vld [vmem:[#allocation2 + $0x158] sm:$0xff]
    %v81 = vld [vmem:[#allocation2 + $0x170] sm:$0xff]
    %v82 = vld [vmem:[#allocation2 + $0x188] sm:$0xff]
    %v83 = vld [vmem:[#allocation2 + $0x1a0] sm:$0xff]
    %v84 = vld [vmem:[#allocation2 + $0x1b8] sm:$0xff]
    %v85 = vld [vmem:[#allocation2 + $0x1d0] sm:$0xff]
    %v86 = vld [vmem:[#allocation2 + $0x1e8] sm:$0xff]
    %v87 = vld [vmem:[#allocation2 + $0x200] sm:$0xff]
    %v88 = vld [vmem:[#allocation2 + $0x218] sm:$0xff]
    %v89 = vld [vmem:[#allocation2 + $0x230] sm:$0xff]
    %v90 = vpack.c.bf16 %v75, %v74
    %v91 = vpack.c.bf16 %v77, %v76
    %v92 = vpack.c.bf16 %v79, %v78
    %v93 = vpack.c.bf16 %v81, %v80
    %v94 = vpack.c.bf16 %v83, %v82
    %v95 = vpack.c.bf16 %v85, %v84
    %v96 = vpack.c.bf16 %v87, %v86
    %v97 = vpack.c.bf16 %v89, %v88
    %s98 = scalar_lea.vmem [#allocation2], 576
    %v99 = vld [vmem:[%s98] ss:$8 sm:$0x7]
    %v100 = vld [vmem:[#allocation2 + $0x241] ss:$0 sm:$0xff]
    %v101 = vld [vmem:[#allocation2 + $0x242] ss:$0 sm:$0xff]
    %v102 = vld [vmem:[#allocation2 + $0x243] ss:$0 sm:$0xff]
    %v103 = vld [vmem:[#allocation2 + $0x244] ss:$0 sm:$0xff]
    %v104 = vld [vmem:[%s0] sm:$0xff]
    %vm105 = vcmask 244736
    %v106 = vsel %vm105, %v104, 0.0
    %v107 = vpack.c.bf16 %v106, %v106
    %v109 = vlaneseq
    %v110 = vshrl.u32 %v109, 7
    %v111 = vsub.s32 0, %v110
    %v112 = vrot.slane %v99, %v111
    %v113 = vlaneseq
    %v114 = vshrl.u32 %v113, 7
    %v115 = vsub.s32 1, %v114
    %v116 = vrot.slane %v99, %v115
    %v117 = vlaneseq
    %v118 = vshrl.u32 %v117, 7
    %v119 = vsub.s32 2, %v118
    %v120 = vrot.slane %v99, %v119
    %vm124 = vcmask 261120
    %v126 = vsel %vm124, %v107, 0
    %128 = vmatprep.subr.bf16.mxu0 %v45
    %129 = vmatpush1.bf16.msra.mxu0 %v44
    %130 = vmatprep.subr.bf16.mxu0 %v48
    %131 = vmatpush1.bf16.msra.mxu0 %v47
    %132 = vmatprep.subr.bf16.mxu0 0
    %133 = vmatpush1.bf16.msra.mxu0 0
    %134 = vmatprep.subr.bf16.mxu0 0
    %135 = vmatpush1.bf16.msra.mxu0 0
    %136 = vmatprep.subr.bf16.mxu0 0
    %137 = vmatpush1.bf16.msra.mxu0 0
    %138 = vmatprep.subr.bf16.mxu0 0
    %139 = vmatpush1.bf16.msra.mxu0 0
    %140 = vmatprep.subr.bf16.mxu0 0
    %141 = vmatpush1.bf16.msra.mxu0 0
    %142 = vmatprep.subr.bf16.mxu0 0
    %143 = vmatpush1.bf16.msra.mxu0 0
    %144 = vmatprep.subr.bf16.mxu0 0
    %145 = vmatpush1.bf16.msra.mxu0 0
    %146 = vmatprep.subr.bf16.mxu0 0
    %147 = vmatpush1.bf16.msra.mxu0 0
    %148 = vmatprep.subr.bf16.mxu0 0
    %149 = vmatpush1.bf16.msra.mxu0 0
    %150 = vmatprep.subr.bf16.mxu0 0
    %151 = vmatpush1.bf16.msra.mxu0 0
    %152 = vmatprep.subr.bf16.mxu0 0
    %153 = vmatpush1.bf16.msra.mxu0 0
    %154 = vmatprep.subr.bf16.mxu0 0
    %155 = vmatpush1.bf16.msra.mxu0 0
    %156 = vmatprep.subr.bf16.mxu0 0
    %157 = vmatpush1.bf16.msra.mxu0 0
    %158 = vmatprep.subr.bf16.mxu0 0
    %159 = vmatpush1.bf16.msra.mxu0 0
    %160 = vmatprep.mubr.bf16.mxu0 0
    %161 = vmatmul.mubr.bf16.gmra.mrb[0].mxu0 %v126
    %v162 = vpop.f32.mrb[0].mxu0
    %v163 = vadd.f32 %v112, %v162
    %v164 = vpop.f32.mrb[0].mxu0
    %v165 = vadd.f32 %v116, %v164
    %v166 = vpop.f32.mrb[0].mxu0
    %v167 = vpop.f32.mrb[0].mxu0
    %168 = vdwg.mxu0
    %169 = vmatprep.subr.bf16.mxu0 0
    %170 = vmatpush1.bf16.msra.mxu0 %v46
    %171 = vmatprep.subr.bf16.mxu0 0
    %172 = vmatpush1.bf16.msra.mxu0 %v49
    %173 = vmatprep.subr.bf16.mxu0 0
    %174 = vmatpush1.bf16.msra.mxu0 0
    %175 = vmatprep.subr.bf16.mxu0 0
    %176 = vmatpush1.bf16.msra.mxu0 0
    %177 = vmatprep.subr.bf16.mxu0 0
    %178 = vmatpush1.bf16.msra.mxu0 0
    %179 = vmatprep.subr.bf16.mxu0 0
    %180 = vmatpush1.bf16.msra.mxu0 0
    %181 = vmatprep.subr.bf16.mxu0 0
    %182 = vmatpush1.bf16.msra.mxu0 0
    %183 = vmatprep.subr.bf16.mxu0 0
    %184 = vmatpush1.bf16.msra.mxu0 0
    %185 = vmatprep.subr.bf16.mxu0 0
    %186 = vmatpush1.bf16.msra.mxu0 0
    %187 = vmatprep.subr.bf16.mxu0 0
    %188 = vmatpush1.bf16.msra.mxu0 0
    %189 = vmatprep.subr.bf16.mxu0 0
    %190 = vmatpush1.bf16.msra.mxu0 0
    %191 = vmatprep.subr.bf16.mxu0 0
    %192 = vmatpush1.bf16.msra.mxu0 0
    %193 = vmatprep.subr.bf16.mxu0 0
    %194 = vmatpush1.bf16.msra.mxu0 0
    %195 = vmatprep.subr.bf16.mxu0 0
    %196 = vmatpush1.bf16.msra.mxu0 0
    %197 = vmatprep.subr.bf16.mxu0 0
    %198 = vmatpush1.bf16.msra.mxu0 0
    %199 = vmatprep.subr.bf16.mxu0 0
    %200 = vmatpush1.bf16.msra.mxu0 0
    %201 = vmatprep.mubr.bf16.mxu0 0
    %202 = vmatmul.mubr.bf16.gmra.mrb[0].mxu0 %v126
    %v203 = vpop.f32.mrb[0].mxu0
    %v204 = vadd.f32 %v120, %v203
    %v205 = vpop.f32.mrb[0].mxu0
    %v206 = vpop.f32.mrb[0].mxu0
    %v207 = vpop.f32.mrb[0].mxu0
    %208 = vdwg.mxu0
    %v209 = vlaneseq
    %v210 = vand.u32 %v209, 127
    %vm211 = vcmp.ge.s32.totalorder %v210, 64
    %vm212 = vcmp.lt.s32.totalorder %v210, 96
    %vm213 = vmand %vm211, %vm212
    %v215 = vsel %vm124, 0, 0
    %217 = vmatprep.subr.bf16.mxu0 0
    %218 = vmatpush1.bf16.msra.mxu0 %v54
    %219 = vmatprep.subr.bf16.mxu0 0
    %220 = vmatpush1.bf16.msra.mxu0 %v55
    %221 = vmatprep.subr.bf16.mxu0 0
    %222 = vmatpush1.bf16.msra.mxu0 0
    %223 = vmatprep.subr.bf16.mxu0 0
    %224 = vmatpush1.bf16.msra.mxu0 0
    %225 = vmatprep.subr.bf16.mxu0 0
    %226 = vmatpush1.bf16.msra.mxu0 0
    %227 = vmatprep.subr.bf16.mxu0 0
    %228 = vmatpush1.bf16.msra.mxu0 0
    %229 = vmatprep.subr.bf16.mxu0 0
    %230 = vmatpush1.bf16.msra.mxu0 0
    %231 = vmatprep.subr.bf16.mxu0 0
    %232 = vmatpush1.bf16.msra.mxu0 0
    %233 = vmatprep.subr.bf16.mxu0 0
    %234 = vmatpush1.bf16.msra.mxu0 0
    %235 = vmatprep.subr.bf16.mxu0 0
    %236 = vmatpush1.bf16.msra.mxu0 0
    %237 = vmatprep.subr.bf16.mxu0 0
    %238 = vmatpush1.bf16.msra.mxu0 0
    %239 = vmatprep.subr.bf16.mxu0 0
    %240 = vmatpush1.bf16.msra.mxu0 0
    %241 = vmatprep.subr.bf16.mxu0 0
    %242 = vmatpush1.bf16.msra.mxu0 0
    %243 = vmatprep.subr.bf16.mxu0 0
    %244 = vmatpush1.bf16.msra.mxu0 0
    %245 = vmatprep.subr.bf16.mxu0 0
    %246 = vmatpush1.bf16.msra.mxu0 0
    %247 = vmatprep.subr.bf16.mxu0 0
    %248 = vmatpush1.bf16.msra.mxu0 0
    %249 = vmatprep.mubr.bf16.mxu0 0
    %250 = vmatmul.mubr.bf16.gmra.mrb[0].mxu0 %v215
    %v251 = vpop.f32.mrb[0].mxu0
    %v252 = vadd.f32 0.0, %v251
    %v253 = vpop.f32.mrb[0].mxu0
    %v254 = vpop.f32.mrb[0].mxu0
    %v255 = vpop.f32.mrb[0].mxu0
    %256 = vdwg.mxu0
    %v257 = vadd.f32 %v163, %v252
    %v258 = vmul.f32 %v257, 0.5
    %v259 = vsel %vm213, %v257, %v258
    %v260 = vtanh.pop %v259
    %v261 = vmul.f32 %v260, 0.5
    %v262 = vadd.f32 %v261, 0.5
    %v263 = vsel %vm213, %v260, %v262
    %v264 = vmul.f32 %v263, 0.0
    %266 = vrot.lane.b32.xlu0 %v263, 64
    %v267 = vpop.permute.xlu0 %266
    %v269 = vmul.f32 %v263, %v267
    %271 = vrot.lane.b32.xlu0 %v269, 32
    %v272 = vpop.permute.xlu0 %271
    %v274 = vadd.f32 %v264, %v272
    %v275 = vtanh.pop %v274
    %277 = vrot.lane.b32.xlu0 %v275, 64
    %v278 = vpop.permute.xlu0 %277
    %v280 = vmul.f32 %v263, %v278
    %v281 = vpack.c.bf16 %v280, %v280
    %283 = vrot.lane.b32.xlu0 %v281, 32
    %v284 = vpop.permute.xlu0 %283
    %v286 = vsel %vm124, %v284, 0
    %288 = vmatprep.subr.bf16.mxu0 0
    %289 = vmatpush1.bf16.msra.mxu0 %v54
    %290 = vmatprep.subr.bf16.mxu0 0
    %291 = vmatpush1.bf16.msra.mxu0 %v55
    %292 = vmatprep.subr.bf16.mxu0 0
    %293 = vmatpush1.bf16.msra.mxu0 0
    %294 = vmatprep.subr.bf16.mxu0 0
    %295 = vmatpush1.bf16.msra.mxu0 0
    %296 = vmatprep.subr.bf16.mxu0 0
    %297 = vmatpush1.bf16.msra.mxu0 0
    %298 = vmatprep.subr.bf16.mxu0 0
    %299 = vmatpush1.bf16.msra.mxu0 0
    %300 = vmatprep.subr.bf16.mxu0 0
    %301 = vmatpush1.bf16.msra.mxu0 0
    %302 = vmatprep.subr.bf16.mxu0 0
    %303 = vmatpush1.bf16.msra.mxu0 0
    %304 = vmatprep.subr.bf16.mxu0 0
    %305 = vmatpush1.bf16.msra.mxu0 0
    %306 = vmatprep.subr.bf16.mxu0 0
    %307 = vmatpush1.bf16.msra.mxu0 0
    %308 = vmatprep.subr.bf16.mxu0 0
    %309 = vmatpush1.bf16.msra.mxu0 0
    %310 = vmatprep.subr.bf16.mxu0 0
    %311 = vmatpush1.bf16.msra.mxu0 0
    %312 = vmatprep.subr.bf16.mxu0 0
    %313 = vmatpush1.bf16.msra.mxu0 0
    %314 = vmatprep.subr.bf16.mxu0 0
    %315 = vmatpush1.bf16.msra.mxu0 0
    %316 = vmatprep.subr.bf16.mxu0 0
    %317 = vmatpush1.bf16.msra.mxu0 0
    %318 = vmatprep.subr.bf16.mxu0 0
    %319 = vmatpush1.bf16.msra.mxu0 0
    %320 = vmatprep.mubr.bf16.mxu0 0
    %321 = vmatmul.mubr.bf16.gmra.mrb[0].mxu0 %v286
    %v322 = vpop.f32.mrb[0].mxu0
    %v323 = vadd.f32 0.0, %v322
    %v324 = vpop.f32.mrb[0].mxu0
    %v325 = vpop.f32.mrb[0].mxu0
    %v326 = vpop.f32.mrb[0].mxu0
    %327 = vdwg.mxu0
    %v328 = vadd.f32 %v165, %v323
    %v329 = vmul.f32 %v328, 0.5
    %v330 = vsel %vm213, %v328, %v329
    %v331 = vtanh.pop %v330
    %v332 = vmul.f32 %v331, 0.5
    %v333 = vadd.f32 %v332, 0.5
    %v334 = vsel %vm213, %v331, %v333
    %v335 = vmul.f32 %v334, %v274
    %337 = vrot.lane.b32.xlu0 %v334, 64
    %v338 = vpop.permute.xlu0 %337
    %v340 = vmul.f32 %v334, %v338
    %342 = vrot.lane.b32.xlu0 %v340, 32
    %v343 = vpop.permute.xlu0 %342
    %v345 = vadd.f32 %v335, %v343
    %v346 = vtanh.pop %v345
    %348 = vrot.lane.b32.xlu0 %v346, 64
    %v349 = vpop.permute.xlu0 %348
    %v351 = vmul.f32 %v334, %v349
    %v352 = vpack.c.bf16 %v351, %v351
    %354 = vrot.lane.b32.xlu0 %v352, 32
    %v355 = vpop.permute.xlu0 %354
    %v357 = vsel %vm124, %v355, 0
    %359 = vmatprep.subr.bf16.mxu0 0
    %360 = vmatpush1.bf16.msra.mxu0 %v54
    %361 = vmatprep.subr.bf16.mxu0 0
    %362 = vmatpush1.bf16.msra.mxu0 %v55
    %363 = vmatprep.subr.bf16.mxu0 0
    %364 = vmatpush1.bf16.msra.mxu0 0
    %365 = vmatprep.subr.bf16.mxu0 0
    %366 = vmatpush1.bf16.msra.mxu0 0
    %367 = vmatprep.subr.bf16.mxu0 0
    %368 = vmatpush1.bf16.msra.mxu0 0
    %369 = vmatprep.subr.bf16.mxu0 0
    %370 = vmatpush1.bf16.msra.mxu0 0
    %371 = vmatprep.subr.bf16.mxu0 0
    %372 = vmatpush1.bf16.msra.mxu0 0
    %373 = vmatprep.subr.bf16.mxu0 0
    %374 = vmatpush1.bf16.msra.mxu0 0
    %375 = vmatprep.subr.bf16.mxu0 0
    %376 = vmatpush1.bf16.msra.mxu0 0
    %377 = vmatprep.subr.bf16.mxu0 0
    %378 = vmatpush1.bf16.msra.mxu0 0
    %379 = vmatprep.subr.bf16.mxu0 0
    %380 = vmatpush1.bf16.msra.mxu0 0
    %381 = vmatprep.subr.bf16.mxu0 0
    %382 = vmatpush1.bf16.msra.mxu0 0
    %383 = vmatprep.subr.bf16.mxu0 0
    %384 = vmatpush1.bf16.msra.mxu0 0
    %385 = vmatprep.subr.bf16.mxu0 0
    %386 = vmatpush1.bf16.msra.mxu0 0
    %387 = vmatprep.subr.bf16.mxu0 0
    %388 = vmatpush1.bf16.msra.mxu0 0
    %389 = vmatprep.subr.bf16.mxu0 0
    %390 = vmatpush1.bf16.msra.mxu0 0
    %391 = vmatprep.mubr.bf16.mxu0 0
    %392 = vmatmul.mubr.bf16.gmra.mrb[0].mxu0 %v357
    %v393 = vpop.f32.mrb[0].mxu0
    %v394 = vadd.f32 0.0, %v393
    %v395 = vpop.f32.mrb[0].mxu0
    %v396 = vpop.f32.mrb[0].mxu0
    %v397 = vpop.f32.mrb[0].mxu0
    %398 = vdwg.mxu0
    %v399 = vadd.f32 %v204, %v394
    %v400 = vmul.f32 %v399, 0.5
    %v401 = vsel %vm213, %v399, %v400
    %v402 = vtanh.pop %v401
    %v403 = vmul.f32 %v402, 0.5
    %v404 = vadd.f32 %v403, 0.5
    %v405 = vsel %vm213, %v402, %v404
    %v406 = vmul.f32 %v405, %v345
    %408 = vrot.lane.b32.xlu0 %v405, 64
    %v409 = vpop.permute.xlu0 %408
    %v411 = vmul.f32 %v405, %v409
    %413 = vrot.lane.b32.xlu0 %v411, 32
    %v414 = vpop.permute.xlu0 %413
    %v416 = vadd.f32 %v406, %v414
    %v417 = vtanh.pop %v416
    %419 = vrot.lane.b32.xlu0 %v417, 64
    %v420 = vpop.permute.xlu0 %419
    %v422 = vmul.f32 %v405, %v420
    %v423 = vld [vmem:[%s1] sm:$0xff]
    %vm424 = vcmask 236544
    %v425 = vsel %vm424, %v423, 0.0
    %v426 = vpack.c.bf16 %v425, %v425
    %v428 = vsel %vm124, %v426, 0
    %430 = vmatprep.subr.bf16.mxu0 0
    %431 = vmatpush1.bf16.msra.mxu0 %v60
    %432 = vmatprep.subr.bf16.mxu0 0
    %433 = vmatpush1.bf16.msra.mxu0 %v61
    %434 = vmatprep.subr.bf16.mxu0 0
    %435 = vmatpush1.bf16.msra.mxu0 0
    %436 = vmatprep.subr.bf16.mxu0 0
    %437 = vmatpush1.bf16.msra.mxu0 0
    %438 = vmatprep.subr.bf16.mxu0 0
    %439 = vmatpush1.bf16.msra.mxu0 0
    %440 = vmatprep.subr.bf16.mxu0 0
    %441 = vmatpush1.bf16.msra.mxu0 0
    %442 = vmatprep.subr.bf16.mxu0 0
    %443 = vmatpush1.bf16.msra.mxu0 0
    %444 = vmatprep.subr.bf16.mxu0 0
    %445 = vmatpush1.bf16.msra.mxu0 0
    %446 = vmatprep.subr.bf16.mxu0 0
    %447 = vmatpush1.bf16.msra.mxu0 0
    %448 = vmatprep.subr.bf16.mxu0 0
    %449 = vmatpush1.bf16.msra.mxu0 0
    %450 = vmatprep.subr.bf16.mxu0 0
    %451 = vmatpush1.bf16.msra.mxu0 0
    %452 = vmatprep.subr.bf16.mxu0 0
    %453 = vmatpush1.bf16.msra.mxu0 0
    %454 = vmatprep.subr.bf16.mxu0 0
    %455 = vmatpush1.bf16.msra.mxu0 0
    %456 = vmatprep.subr.bf16.mxu0 0
    %457 = vmatpush1.bf16.msra.mxu0 0
    %458 = vmatprep.subr.bf16.mxu0 0
    %459 = vmatpush1.bf16.msra.mxu0 0
    %460 = vmatprep.subr.bf16.mxu0 0
    %461 = vmatpush1.bf16.msra.mxu0 0
    %462 = vmatprep.mubr.bf16.mxu0 0
    %463 = vmatmul.mubr.bf16.gmra.mrb[0].mxu0 %v428
    %v464 = vpop.f32.mrb[0].mxu0
    %v465 = vadd.f32 %v100, %v464
    %v466 = vpop.f32.mrb[0].mxu0
    %v467 = vpop.f32.mrb[0].mxu0
    %v468 = vpop.f32.mrb[0].mxu0
    %469 = vdwg.mxu0
    %v470 = vmax.f32 %v465, 0.0
    %v471 = vld [vmem:[%s2] sm:$0xff]
    %472 = vset.pattern.permute.xlu0 0
    %473 = vperm.xlu0 %472, %v471
    %v474 = vpop.permute.xlu0 %473
    %vm475 = vcmp.eq.s32.totalorder %v210, %v474
    %v476 = vadd.s32 %v471, 50
    %477 = vset.pattern.permute.xlu0 1
    %478 = vperm.xlu0 %477, %v476
    %v479 = vpop.permute.xlu0 %478
    %vm480 = vcmp.eq.s32.totalorder %v210, %v479
    %vm481 = vmor %vm475, %vm480
    %v482 = vadd.s32 %v471, 70
    %483 = vset.pattern.permute.xlu0 2
    %484 = vperm.xlu0 %483, %v482
    %v485 = vpop.permute.xlu0 %484
    %vm486 = vcmp.eq.s32.totalorder %v210, %v485
    %vm487 = vmor %vm481, %vm486
    %v488 = vadd.s32 %v471, 94
    %489 = vset.pattern.permute.xlu0 3
    %490 = vperm.xlu0 %489, %v488
    %v491 = vpop.permute.xlu0 %490
    %vm492 = vcmp.eq.s32.totalorder %v210, %v491
    %vm493 = vmor %vm487, %vm492
    %v494 = vsel %vm493, 1, 0
    %v495 = vcvt.s32.f32 %v494
    %v496 = vpack.c.bf16 %v495, %v495
    %497 = vmatprep.subr.bf16.mxu0 0
    %498 = vmatpush1.bf16.msra.mxu0 %v90
    %499 = vmatprep.subr.bf16.mxu0 0
    %500 = vmatpush1.bf16.msra.mxu0 %v91
    %501 = vmatprep.subr.bf16.mxu0 0
    %502 = vmatpush1.bf16.msra.mxu0 %v92
    %503 = vmatprep.subr.bf16.mxu0 0
    %504 = vmatpush1.bf16.msra.mxu0 %v93
    %505 = vmatprep.subr.bf16.mxu0 0
    %506 = vmatpush1.bf16.msra.mxu0 %v94
    %507 = vmatprep.subr.bf16.mxu0 0
    %508 = vmatpush1.bf16.msra.mxu0 %v95
    %509 = vmatprep.subr.bf16.mxu0 0
    %510 = vmatpush1.bf16.msra.mxu0 %v96
    %511 = vmatprep.subr.bf16.mxu0 0
    %512 = vmatpush1.bf16.msra.mxu0 %v97
    %513 = vmatprep.subr.bf16.mxu0 0
    %514 = vmatpush1.bf16.msra.mxu0 0
    %515 = vmatprep.subr.bf16.mxu0 0
    %516 = vmatpush1.bf16.msra.mxu0 0
    %517 = vmatprep.subr.bf16.mxu0 0
    %518 = vmatpush1.bf16.msra.mxu0 0
    %519 = vmatprep.subr.bf16.mxu0 0
    %520 = vmatpush1.bf16.msra.mxu0 0
    %521 = vmatprep.subr.bf16.mxu0 0
    %522 = vmatpush1.bf16.msra.mxu0 0
    %523 = vmatprep.subr.bf16.mxu0 0
    %524 = vmatpush1.bf16.msra.mxu0 0
    %525 = vmatprep.subr.bf16.mxu0 0
    %526 = vmatpush1.bf16.msra.mxu0 0
    %527 = vmatprep.subr.bf16.mxu0 0
    %528 = vmatpush1.bf16.msra.mxu0 0
    %529 = vmatprep.mubr.bf16.mxu0 0
    %530 = vmatmul.mubr.bf16.gmra.mrb[0].mxu0 %v496
    %v531 = vpop.f32.mrb[0].mxu0
    %v532 = vadd.f32 0.0, %v531
    %v533 = vpop.f32.mrb[0].mxu0
    %v534 = vpop.f32.mrb[0].mxu0
    %v535 = vpop.f32.mrb[0].mxu0
    %536 = vdwg.mxu0
    %538 = vrot.lane.b32.xlu0 %v422, 32
    %v539 = vpop.permute.xlu0 %538
    %542 = vrot.lane.b32.xlu0 %v470, 32
    %v543 = vpop.permute.xlu0 %542
    %v545 = vsel %vm124, %v539, %v543
    %v546 = vpack.c.bf16 %v545, %v545
    %vm547 = vcmask 523264
    %v549 = vsel %vm547, %v546, 0
    %551 = vmatprep.subr.bf16.mxu0 0
    %552 = vmatpush1.bf16.msra.mxu0 %v70
    %553 = vmatprep.subr.bf16.mxu0 0
    %554 = vmatpush1.bf16.msra.mxu0 %v71
    %555 = vmatprep.subr.bf16.mxu0 0
    %556 = vmatpush1.bf16.msra.mxu0 %v72
    %557 = vmatprep.subr.bf16.mxu0 0
    %558 = vmatpush1.bf16.msra.mxu0 %v73
    %559 = vmatprep.subr.bf16.mxu0 0
    %560 = vmatpush1.bf16.msra.mxu0 0
    %561 = vmatprep.subr.bf16.mxu0 0
    %562 = vmatpush1.bf16.msra.mxu0 0
    %563 = vmatprep.subr.bf16.mxu0 0
    %564 = vmatpush1.bf16.msra.mxu0 0
    %565 = vmatprep.subr.bf16.mxu0 0
    %566 = vmatpush1.bf16.msra.mxu0 0
    %567 = vmatprep.subr.bf16.mxu0 0
    %568 = vmatpush1.bf16.msra.mxu0 0
    %569 = vmatprep.subr.bf16.mxu0 0
    %570 = vmatpush1.bf16.msra.mxu0 0
    %571 = vmatprep.subr.bf16.mxu0 0
    %572 = vmatpush1.bf16.msra.mxu0 0
    %573 = vmatprep.subr.bf16.mxu0 0
    %574 = vmatpush1.bf16.msra.mxu0 0
    %575 = vmatprep.subr.bf16.mxu0 0
    %576 = vmatpush1.bf16.msra.mxu0 0
    %577 = vmatprep.subr.bf16.mxu0 0
    %578 = vmatpush1.bf16.msra.mxu0 0
    %579 = vmatprep.subr.bf16.mxu0 0
    %580 = vmatpush1.bf16.msra.mxu0 0
    %581 = vmatprep.subr.bf16.mxu0 0
    %582 = vmatpush1.bf16.msra.mxu0 0
    %583 = vmatprep.mubr.bf16.mxu0 0
    %584 = vmatmul.mubr.bf16.gmra.mrb[0].mxu0 %v549
    %v585 = vpop.f32.mrb[0].mxu0
    %v586 = vadd.f32 %v532, %v585
    %v587 = vpop.f32.mrb[0].mxu0
    %v588 = vpop.f32.mrb[0].mxu0
    %v589 = vpop.f32.mrb[0].mxu0
    %590 = vdwg.mxu0
    %v591 = vadd.f32 %v586, %v101
    %v592 = vmax.f32 %v591, 0.0
    %v593 = vmul.f32 %v592, %v102
    %v594 = vsel %vm547, %v593, 0.0
    %595 = vadd.xlane.f32.xlu0 %v594
    %v596 = vpop.xlane.xlu0 %595
    %v597 = vadd.f32 %v596, %v103
    %vm598 = vcmask 7168
    %599 = vst.msk [vmem:[%s4] sm:$0xff] %vm598, %v597
    // Predicated region
    $region22: #{voyage_forward.1} parent=1 // pred_check
      _
    $region23: #{voyage_forward.1} parent=1 // pred_check_branch
      %601 = sbr.rel (0) target = $region25
    $region24: #{voyage_forward.1} parent=1 // pred_region
      _
    $region25: #{voyage_forward.1} parent=1 // pred_fallthru
      _
    // Predicated region
    $region26: #{voyage_forward.1} parent=1 // pred_check
      _
    $region27: #{voyage_forward.1} parent=1 // pred_check_branch
      %603 = sbr.rel (0) target = $region29
    $region28: #{voyage_forward.1} parent=1 // pred_region
      _
    $region29: #{voyage_forward.1} parent=1 // pred_fallthru
      _
    %604 = vsyncpa [#allocation3], 1

</llo_original>
